<compile_context>
chip_gen: v5e
topology: v5e:2x2
jax: 0.10.0
libtpu: 0.0.40
codegen_flags: <defaults>
</compile_context>

<pallas_src>
import functools

import jax
import jax.numpy as jnp
from jax.experimental import pallas as pl
from jax.experimental.pallas import tpu as pltpu


def _bilstm_head_kernel(T, B, H,
                        x_ref,        # (T*B, D) bf16, time-major flattened input
                        wx_ref,       # (D, 8H) bf16, [W_ih_fwd | W_ih_bwd], gates (i,f,o,g)
                        bx_ref,       # (1, 8H) f32, fused biases for both directions
                        whh_ref,      # (H, 4H) bf16, forward W_hh, gates (i,f,o,g)
                        wcf_ref,      # (1, H)  f32, classifier row for forward hidden
                        wcb_ref,      # (1, H)  f32, classifier row for backward hidden
                        bc_ref,       # (1,)    f32 in SMEM, classifier bias
                        out_ref):     # (B, 1)  f32, sigmoid probabilities
    # (1) Hoisted input projection for all T steps and both directions in one
    #     well-shaped MXU matmul; bias added once (not per timestep).
    gates_x = (jnp.dot(x_ref[...], wx_ref[...],
                       preferred_element_type=jnp.float32)
               + bx_ref[...])                          # (T*B, 8H) f32

    whh = whh_ref[...]

    h = jnp.zeros((B, H), jnp.float32)
    c = jnp.zeros((B, H), jnp.float32)

    # (2) Forward recurrence, fully statically unrolled (T fixed at trace time):
    #     only the small h @ W_hh dot remains on the sequential critical path.
    for t in range(T):
        gates = (gates_x[t * B:(t + 1) * B, :4 * H]
                 + jnp.dot(h.astype(whh.dtype), whh,
                           preferred_element_type=jnp.float32))
        s = jax.nn.sigmoid(gates[:, :3 * H])           # one EUP pass: i, f, o
        g = jnp.tanh(gates[:, 3 * H:])                 # one EUP pass: g
        i_g = s[:, :H]
        f_g = s[:, H:2 * H]
        o_g = s[:, 2 * H:3 * H]
        c = f_g * c + i_g * g
        h = o_g * jnp.tanh(c)

    # (3) Backward direction at the last timestep from zero state:
    #     h0 @ W_hh == 0 (dead matmul removed) and f * c0 == 0, so only the
    #     already-hoisted input projection of x[T-1] is needed.
    gb = gates_x[(T - 1) * B:T * B, 4 * H:]
    sb = jax.nn.sigmoid(gb[:, :3 * H])
    gg = jnp.tanh(gb[:, 3 * H:])
    h_bwd = sb[:, 2 * H:3 * H] * jnp.tanh(sb[:, :H] * gg)

    # (4) Classifier Linear(2H -> 1): an N=1 MXU matmul wastes the systolic
    #     array, so use a VPU multiply + lane reduction.  Dropout is identity
    #     in eval mode.  Scalar bias comes from SMEM.
    logits = (jnp.sum(h * wcf_ref[...], axis=-1, keepdims=True)
              + jnp.sum(h_bwd * wcb_ref[...], axis=-1, keepdims=True)
              + bc_ref[0])
    out_ref[...] = jax.nn.sigmoid(logits)


def init_params(key, vocab_size, vector_dim):
    D = vector_dim
    H = vector_dim
    ks = jax.random.split(key, 12)
    s = 1.0 / jnp.sqrt(jnp.float32(H))
    p = {
        "embedding": jax.random.normal(ks[0], (vocab_size, D), jnp.float32),
        # forward direction (PyTorch layout: (4H, D) / (4H, H) / (4H,), gate order i,f,g,o)
        "w_ih_f": jax.random.uniform(ks[1], (4 * H, D), jnp.float32, -s, s),
        "w_hh_f": jax.random.uniform(ks[2], (4 * H, H), jnp.float32, -s, s),
        "b_ih_f": jax.random.uniform(ks[3], (4 * H,), jnp.float32, -s, s),
        "b_hh_f": jax.random.uniform(ks[4], (4 * H,), jnp.float32, -s, s),
        # backward direction
        "w_ih_b": jax.random.uniform(ks[5], (4 * H, D), jnp.float32, -s, s),
        "w_hh_b": jax.random.uniform(ks[6], (4 * H, H), jnp.float32, -s, s),
        "b_ih_b": jax.random.uniform(ks[7], (4 * H,), jnp.float32, -s, s),
        "b_hh_b": jax.random.uniform(ks[8], (4 * H,), jnp.float32, -s, s),
        # classifier Linear(2H -> 1)
        "w_c": jax.random.uniform(ks[9], (1, 2 * H), jnp.float32, -s, s),
        "b_c": jax.random.uniform(ks[10], (1,), jnp.float32, -s, s),
    }
    return p


def _reorder_gates(w):
    """PyTorch gate order (i, f, g, o) -> (i, f, o, g) along the leading 4H axis."""
    i, f, g, o = jnp.split(w, 4, axis=0)
    return jnp.concatenate([i, f, o, g], axis=0)


def torch_model_forward(x_tokens, params):
    """x_tokens: (B, T) int32 token ids -> (B, 1) sigmoid probabilities."""
    B, T = x_tokens.shape
    D = params["embedding"].shape[1]
    H = D

    # Glue: embedding gather + layout prep in plain JAX.  Time-major, flattened
    # to (T*B, D) so the kernel's hoisted input projection is one big matmul.
    emb = jnp.take(params["embedding"], x_tokens, axis=0)               # (B, T, D)
    x_flat = (jnp.transpose(emb, (1, 0, 2))
              .reshape(T * B, D)
              .astype(jnp.bfloat16))                                    # MXU operand

    # Fuse both directions' input-to-hidden weights into one (D, 8H) operand,
    # with gates reordered (i, f, o, g); biases folded and fused the same way.
    wih_f = _reorder_gates(params["w_ih_f"]).T                          # (D, 4H)
    wih_b = _reorder_gates(params["w_ih_b"]).T                          # (D, 4H)
    w_x = jnp.concatenate([wih_f, wih_b], axis=1).astype(jnp.bfloat16)  # (D, 8H)
    b_f = _reorder_gates(params["b_ih_f"] + params["b_hh_f"])
    b_b = _reorder_gates(params["b_ih_b"] + params["b_hh_b"])
    b_x = jnp.concatenate([b_f, b_b]).reshape(1, 8 * H).astype(jnp.float32)

    # Forward hidden-to-hidden weight only; the backward one is dead (zero
    # initial state) and is intentionally not passed to the kernel.
    whh_f = _reorder_gates(params["w_hh_f"]).T.astype(jnp.bfloat16)     # (H, 4H)

    wc = params["w_c"]                                                  # (1, 2H)
    wcf = wc[:, :H].astype(jnp.float32)                                 # (1, H)
    wcb = wc[:, H:].astype(jnp.float32)                                 # (1, H)
    bc = params["b_c"].astype(jnp.float32)                              # (1,)

    vmem = pl.BlockSpec(memory_space=pltpu.MemorySpace.VMEM)
    smem = pl.BlockSpec(memory_space=pltpu.MemorySpace.SMEM)

    # TODO(synk): when scaling beyond this toy B/T/H, add a batch grid axis with
    # dimension_semantics=("parallel",) (uses both v7x TensorCores) and stream x
    # with a T-chunked BlockSpec instead of keeping it fully VMEM-resident
    # (v7x only has 64 MiB VMEM).
    out = pl.pallas_call(
        functools.partial(_bilstm_head_kernel, T, B, H),
        out_shape=jax.ShapeDtypeStruct((B, 1), jnp.float32),
        in_specs=[vmem, vmem, vmem, vmem, vmem, vmem, smem],
        out_specs=vmem,
    )(x_flat, w_x, b_x, whh_f, wcf, wcb, bc)
    return out


if __name__ == "__main__":
    # Small shapes consistent with the module: vocab=30, vector_dim=32, seq=8, batch=2.
    VOCAB = 30
    VECTOR_DIM = 32
    SENT_LEN = 8
    BATCH = 2

    key = jax.random.PRNGKey(0)
    k_inp, k_par = jax.random.split(key)

    params = init_params(k_par, VOCAB, VECTOR_DIM)
    x = jax.random.randint(k_inp, (BATCH, SENT_LEN), 0, VOCAB, dtype=jnp.int32)

    y_pred = jax.jit(torch_model_forward)(x, params)
    jax.block_until_ready(y_pred)

    assert y_pred.shape == (BATCH, 1)
    assert bool(jnp.all(jnp.isfinite(y_pred)))
    print("KERNEL_OK")
</pallas_src>

<mosaic_0001>
module attributes {stable_mosaic.version = 11 : i64} {
  func.func @_bilstm_head_kernel(%arg0: memref<16x32xbf16, #tpu.memory_space<vmem>>, %arg1: memref<32x256xbf16, #tpu.memory_space<vmem>>, %arg2: memref<1x256xf32, #tpu.memory_space<vmem>>, %arg3: memref<32x128xbf16, #tpu.memory_space<vmem>>, %arg4: memref<1x32xf32, #tpu.memory_space<vmem>>, %arg5: memref<1x32xf32, #tpu.memory_space<vmem>>, %arg6: memref<1xf32, #tpu.memory_space<smem>>, %arg7: memref<2x1xf32, #tpu.memory_space<vmem>>) attributes {dimension_semantics = [], scalar_prefetch = 0 : i64, scratch_operands = 0 : i64, tpu.core_type = #tpu.core_type<tc>} {
    %c0 = arith.constant 0 : index
    %c0_0 = arith.constant 0 : index
    %0 = vector.load %arg0[%c0, %c0_0] : memref<16x32xbf16, #tpu.memory_space<vmem>>, vector<16x32xbf16>
    %c0_1 = arith.constant 0 : index
    %c0_2 = arith.constant 0 : index
    %1 = vector.load %arg1[%c0_1, %c0_2] : memref<32x256xbf16, #tpu.memory_space<vmem>>, vector<32x256xbf16>
    %cst = arith.constant dense<0.000000e+00> : vector<16x256xf32>
    %2 = tpu.matmul %0, %1, %cst {dimension_numbers = #tpu.dot_dimension_numbers<[1], [0], [0], [1], [0, 0, 1, 1], [], []>} : vector<16x32xbf16>, vector<32x256xbf16>, vector<16x256xf32> -> vector<16x256xf32>
    %c0_3 = arith.constant 0 : index
    %c0_4 = arith.constant 0 : index
    %3 = vector.load %arg2[%c0_3, %c0_4] : memref<1x256xf32, #tpu.memory_space<vmem>>, vector<1x256xf32>
    %4 = vector.broadcast %3 : vector<1x256xf32> to vector<16x256xf32>
    %5 = arith.addf %2, %4 : vector<16x256xf32>
    %c0_5 = arith.constant 0 : index
    %c0_6 = arith.constant 0 : index
    %6 = vector.load %arg3[%c0_5, %c0_6] : memref<32x128xbf16, #tpu.memory_space<vmem>>, vector<32x128xbf16>
    %cst_7 = arith.constant 0.000000e+00 : f32
    %7 = vector.broadcast %cst_7 : f32 to vector<2x32xf32>
    %cst_8 = arith.constant 0.000000e+00 : f32
    %8 = vector.broadcast %cst_8 : f32 to vector<2x32xf32>
    %9 = vector.extract_strided_slice %5 {offsets = [0, 0], sizes = [2, 128], strides = [1, 1]} : vector<16x256xf32> to vector<2x128xf32>
    %10 = arith.truncf %7 : vector<2x32xf32> to vector<2x32xbf16>
    %cst_9 = arith.constant dense<0.000000e+00> : vector<2x128xf32>
    %11 = tpu.matmul %10, %6, %cst_9 {dimension_numbers = #tpu.dot_dimension_numbers<[1], [0], [0], [1], [0, 0, 1, 1], [], []>} : vector<2x32xbf16>, vector<32x128xbf16>, vector<2x128xf32> -> vector<2x128xf32>
    %12 = arith.addf %9, %11 : vector<2x128xf32>
    %13 = vector.extract_strided_slice %12 {offsets = [0, 0], sizes = [2, 96], strides = [1, 1]} : vector<2x128xf32> to vector<2x96xf32>
    %14 = arith.negf %13 : vector<2x96xf32>
    %15 = math.exp %14 : vector<2x96xf32>
    %cst_10 = arith.constant 1.000000e+00 : f32
    %16 = vector.broadcast %cst_10 : f32 to vector<2x96xf32>
    %17 = arith.addf %16, %15 : vector<2x96xf32>
    %18 = arith.divf %16, %17 : vector<2x96xf32>
    %19 = vector.extract_strided_slice %12 {offsets = [0, 96], sizes = [2, 32], strides = [1, 1]} : vector<2x128xf32> to vector<2x32xf32>
    %20 = math.tanh %19 : vector<2x32xf32>
    %21 = vector.extract_strided_slice %18 {offsets = [0, 0], sizes = [2, 32], strides = [1, 1]} : vector<2x96xf32> to vector<2x32xf32>
    %22 = vector.extract_strided_slice %18 {offsets = [0, 32], sizes = [2, 32], strides = [1, 1]} : vector<2x96xf32> to vector<2x32xf32>
    %23 = vector.extract_strided_slice %18 {offsets = [0, 64], sizes = [2, 32], strides = [1, 1]} : vector<2x96xf32> to vector<2x32xf32>
    %24 = arith.mulf %22, %8 : vector<2x32xf32>
    %25 = arith.mulf %21, %20 : vector<2x32xf32>
    %26 = arith.addf %24, %25 : vector<2x32xf32>
    %27 = math.tanh %26 : vector<2x32xf32>
    %28 = arith.mulf %23, %27 : vector<2x32xf32>
    %29 = vector.extract_strided_slice %5 {offsets = [2, 0], sizes = [2, 128], strides = [1, 1]} : vector<16x256xf32> to vector<2x128xf32>
    %30 = arith.truncf %28 : vector<2x32xf32> to vector<2x32xbf16>
    %cst_11 = arith.constant dense<0.000000e+00> : vector<2x128xf32>
    %31 = tpu.matmul %30, %6, %cst_11 {dimension_numbers = #tpu.dot_dimension_numbers<[1], [0], [0], [1], [0, 0, 1, 1], [], []>} : vector<2x32xbf16>, vector<32x128xbf16>, vector<2x128xf32> -> vector<2x128xf32>
    %32 = arith.addf %29, %31 : vector<2x128xf32>
    %33 = vector.extract_strided_slice %32 {offsets = [0, 0], sizes = [2, 96], strides = [1, 1]} : vector<2x128xf32> to vector<2x96xf32>
    %34 = arith.negf %33 : vector<2x96xf32>
    %35 = math.exp %34 : vector<2x96xf32>
    %cst_12 = arith.constant 1.000000e+00 : f32
    %36 = vector.broadcast %cst_12 : f32 to vector<2x96xf32>
    %37 = arith.addf %36, %35 : vector<2x96xf32>
    %38 = arith.divf %36, %37 : vector<2x96xf32>
    %39 = vector.extract_strided_slice %32 {offsets = [0, 96], sizes = [2, 32], strides = [1, 1]} : vector<2x128xf32> to vector<2x32xf32>
    %40 = math.tanh %39 : vector<2x32xf32>
    %41 = vector.extract_strided_slice %38 {offsets = [0, 0], sizes = [2, 32], strides = [1, 1]} : vector<2x96xf32> to vector<2x32xf32>
    %42 = vector.extract_strided_slice %38 {offsets = [0, 32], sizes = [2, 32], strides = [1, 1]} : vector<2x96xf32> to vector<2x32xf32>
    %43 = vector.extract_strided_slice %38 {offsets = [0, 64], sizes = [2, 32], strides = [1, 1]} : vector<2x96xf32> to vector<2x32xf32>
    %44 = arith.mulf %42, %26 : vector<2x32xf32>
    %45 = arith.mulf %41, %40 : vector<2x32xf32>
    %46 = arith.addf %44, %45 : vector<2x32xf32>
    %47 = math.tanh %46 : vector<2x32xf32>
    %48 = arith.mulf %43, %47 : vector<2x32xf32>
    %49 = vector.extract_strided_slice %5 {offsets = [4, 0], sizes = [2, 128], strides = [1, 1]} : vector<16x256xf32> to vector<2x128xf32>
    %50 = arith.truncf %48 : vector<2x32xf32> to vector<2x32xbf16>
    %cst_13 = arith.constant dense<0.000000e+00> : vector<2x128xf32>
    %51 = tpu.matmul %50, %6, %cst_13 {dimension_numbers = #tpu.dot_dimension_numbers<[1], [0], [0], [1], [0, 0, 1, 1], [], []>} : vector<2x32xbf16>, vector<32x128xbf16>, vector<2x128xf32> -> vector<2x128xf32>
    %52 = arith.addf %49, %51 : vector<2x128xf32>
    %53 = vector.extract_strided_slice %52 {offsets = [0, 0], sizes = [2, 96], strides = [1, 1]} : vector<2x128xf32> to vector<2x96xf32>
    %54 = arith.negf %53 : vector<2x96xf32>
    %55 = math.exp %54 : vector<2x96xf32>
    %cst_14 = arith.constant 1.000000e+00 : f32
    %56 = vector.broadcast %cst_14 : f32 to vector<2x96xf32>
    %57 = arith.addf %56, %55 : vector<2x96xf32>
    %58 = arith.divf %56, %57 : vector<2x96xf32>
    %59 = vector.extract_strided_slice %52 {offsets = [0, 96], sizes = [2, 32], strides = [1, 1]} : vector<2x128xf32> to vector<2x32xf32>
    %60 = math.tanh %59 : vector<2x32xf32>
    %61 = vector.extract_strided_slice %58 {offsets = [0, 0], sizes = [2, 32], strides = [1, 1]} : vector<2x96xf32> to vector<2x32xf32>
    %62 = vector.extract_strided_slice %58 {offsets = [0, 32], sizes = [2, 32], strides = [1, 1]} : vector<2x96xf32> to vector<2x32xf32>
    %63 = vector.extract_strided_slice %58 {offsets = [0, 64], sizes = [2, 32], strides = [1, 1]} : vector<2x96xf32> to vector<2x32xf32>
    %64 = arith.mulf %62, %46 : vector<2x32xf32>
    %65 = arith.mulf %61, %60 : vector<2x32xf32>
    %66 = arith.addf %64, %65 : vector<2x32xf32>
    %67 = math.tanh %66 : vector<2x32xf32>
    %68 = arith.mulf %63, %67 : vector<2x32xf32>
    %69 = vector.extract_strided_slice %5 {offsets = [6, 0], sizes = [2, 128], strides = [1, 1]} : vector<16x256xf32> to vector<2x128xf32>
    %70 = arith.truncf %68 : vector<2x32xf32> to vector<2x32xbf16>
    %cst_15 = arith.constant dense<0.000000e+00> : vector<2x128xf32>
    %71 = tpu.matmul %70, %6, %cst_15 {dimension_numbers = #tpu.dot_dimension_numbers<[1], [0], [0], [1], [0, 0, 1, 1], [], []>} : vector<2x32xbf16>, vector<32x128xbf16>, vector<2x128xf32> -> vector<2x128xf32>
    %72 = arith.addf %69, %71 : vector<2x128xf32>
    %73 = vector.extract_strided_slice %72 {offsets = [0, 0], sizes = [2, 96], strides = [1, 1]} : vector<2x128xf32> to vector<2x96xf32>
    %74 = arith.negf %73 : vector<2x96xf32>
    %75 = math.exp %74 : vector<2x96xf32>
    %cst_16 = arith.constant 1.000000e+00 : f32
    %76 = vector.broadcast %cst_16 : f32 to vector<2x96xf32>
    %77 = arith.addf %76, %75 : vector<2x96xf32>
    %78 = arith.divf %76, %77 : vector<2x96xf32>
    %79 = vector.extract_strided_slice %72 {offsets = [0, 96], sizes = [2, 32], strides = [1, 1]} : vector<2x128xf32> to vector<2x32xf32>
    %80 = math.tanh %79 : vector<2x32xf32>
    %81 = vector.extract_strided_slice %78 {offsets = [0, 0], sizes = [2, 32], strides = [1, 1]} : vector<2x96xf32> to vector<2x32xf32>
    %82 = vector.extract_strided_slice %78 {offsets = [0, 32], sizes = [2, 32], strides = [1, 1]} : vector<2x96xf32> to vector<2x32xf32>
    %83 = vector.extract_strided_slice %78 {offsets = [0, 64], sizes = [2, 32], strides = [1, 1]} : vector<2x96xf32> to vector<2x32xf32>
    %84 = arith.mulf %82, %66 : vector<2x32xf32>
    %85 = arith.mulf %81, %80 : vector<2x32xf32>
    %86 = arith.addf %84, %85 : vector<2x32xf32>
    %87 = math.tanh %86 : vector<2x32xf32>
    %88 = arith.mulf %83, %87 : vector<2x32xf32>
    %89 = vector.extract_strided_slice %5 {offsets = [8, 0], sizes = [2, 128], strides = [1, 1]} : vector<16x256xf32> to vector<2x128xf32>
    %90 = arith.truncf %88 : vector<2x32xf32> to vector<2x32xbf16>
    %cst_17 = arith.constant dense<0.000000e+00> : vector<2x128xf32>
    %91 = tpu.matmul %90, %6, %cst_17 {dimension_numbers = #tpu.dot_dimension_numbers<[1], [0], [0], [1], [0, 0, 1, 1], [], []>} : vector<2x32xbf16>, vector<32x128xbf16>, vector<2x128xf32> -> vector<2x128xf32>
    %92 = arith.addf %89, %91 : vector<2x128xf32>
    %93 = vector.extract_strided_slice %92 {offsets = [0, 0], sizes = [2, 96], strides = [1, 1]} : vector<2x128xf32> to vector<2x96xf32>
    %94 = arith.negf %93 : vector<2x96xf32>
    %95 = math.exp %94 : vector<2x96xf32>
    %cst_18 = arith.constant 1.000000e+00 : f32
    %96 = vector.broadcast %cst_18 : f32 to vector<2x96xf32>
    %97 = arith.addf %96, %95 : vector<2x96xf32>
    %98 = arith.divf %96, %97 : vector<2x96xf32>
    %99 = vector.extract_strided_slice %92 {offsets = [0, 96], sizes = [2, 32], strides = [1, 1]} : vector<2x128xf32> to vector<2x32xf32>
    %100 = math.tanh %99 : vector<2x32xf32>
    %101 = vector.extract_strided_slice %98 {offsets = [0, 0], sizes = [2, 32], strides = [1, 1]} : vector<2x96xf32> to vector<2x32xf32>
    %102 = vector.extract_strided_slice %98 {offsets = [0, 32], sizes = [2, 32], strides = [1, 1]} : vector<2x96xf32> to vector<2x32xf32>
    %103 = vector.extract_strided_slice %98 {offsets = [0, 64], sizes = [2, 32], strides = [1, 1]} : vector<2x96xf32> to vector<2x32xf32>
    %104 = arith.mulf %102, %86 : vector<2x32xf32>
    %105 = arith.mulf %101, %100 : vector<2x32xf32>
    %106 = arith.addf %104, %105 : vector<2x32xf32>
    %107 = math.tanh %106 : vector<2x32xf32>
    %108 = arith.mulf %103, %107 : vector<2x32xf32>
    %109 = vector.extract_strided_slice %5 {offsets = [10, 0], sizes = [2, 128], strides = [1, 1]} : vector<16x256xf32> to vector<2x128xf32>
    %110 = arith.truncf %108 : vector<2x32xf32> to vector<2x32xbf16>
    %cst_19 = arith.constant dense<0.000000e+00> : vector<2x128xf32>
    %111 = tpu.matmul %110, %6, %cst_19 {dimension_numbers = #tpu.dot_dimension_numbers<[1], [0], [0], [1], [0, 0, 1, 1], [], []>} : vector<2x32xbf16>, vector<32x128xbf16>, vector<2x128xf32> -> vector<2x128xf32>
    %112 = arith.addf %109, %111 : vector<2x128xf32>
    %113 = vector.extract_strided_slice %112 {offsets = [0, 0], sizes = [2, 96], strides = [1, 1]} : vector<2x128xf32> to vector<2x96xf32>
    %114 = arith.negf %113 : vector<2x96xf32>
    %115 = math.exp %114 : vector<2x96xf32>
    %cst_20 = arith.constant 1.000000e+00 : f32
    %116 = vector.broadcast %cst_20 : f32 to vector<2x96xf32>
    %117 = arith.addf %116, %115 : vector<2x96xf32>
    %118 = arith.divf %116, %117 : vector<2x96xf32>
    %119 = vector.extract_strided_slice %112 {offsets = [0, 96], sizes = [2, 32], strides = [1, 1]} : vector<2x128xf32> to vector<2x32xf32>
    %120 = math.tanh %119 : vector<2x32xf32>
    %121 = vector.extract_strided_slice %118 {offsets = [0, 0], sizes = [2, 32], strides = [1, 1]} : vector<2x96xf32> to vector<2x32xf32>
    %122 = vector.extract_strided_slice %118 {offsets = [0, 32], sizes = [2, 32], strides = [1, 1]} : vector<2x96xf32> to vector<2x32xf32>
    %123 = vector.extract_strided_slice %118 {offsets = [0, 64], sizes = [2, 32], strides = [1, 1]} : vector<2x96xf32> to vector<2x32xf32>
    %124 = arith.mulf %122, %106 : vector<2x32xf32>
    %125 = arith.mulf %121, %120 : vector<2x32xf32>
    %126 = arith.addf %124, %125 : vector<2x32xf32>
    %127 = math.tanh %126 : vector<2x32xf32>
    %128 = arith.mulf %123, %127 : vector<2x32xf32>
    %129 = vector.extract_strided_slice %5 {offsets = [12, 0], sizes = [2, 128], strides = [1, 1]} : vector<16x256xf32> to vector<2x128xf32>
    %130 = arith.truncf %128 : vector<2x32xf32> to vector<2x32xbf16>
    %cst_21 = arith.constant dense<0.000000e+00> : vector<2x128xf32>
    %131 = tpu.matmul %130, %6, %cst_21 {dimension_numbers = #tpu.dot_dimension_numbers<[1], [0], [0], [1], [0, 0, 1, 1], [], []>} : vector<2x32xbf16>, vector<32x128xbf16>, vector<2x128xf32> -> vector<2x128xf32>
    %132 = arith.addf %129, %131 : vector<2x128xf32>
    %133 = vector.extract_strided_slice %132 {offsets = [0, 0], sizes = [2, 96], strides = [1, 1]} : vector<2x128xf32> to vector<2x96xf32>
    %134 = arith.negf %133 : vector<2x96xf32>
    %135 = math.exp %134 : vector<2x96xf32>
    %cst_22 = arith.constant 1.000000e+00 : f32
    %136 = vector.broadcast %cst_22 : f32 to vector<2x96xf32>
    %137 = arith.addf %136, %135 : vector<2x96xf32>
    %138 = arith.divf %136, %137 : vector<2x96xf32>
    %139 = vector.extract_strided_slice %132 {offsets = [0, 96], sizes = [2, 32], strides = [1, 1]} : vector<2x128xf32> to vector<2x32xf32>
    %140 = math.tanh %139 : vector<2x32xf32>
    %141 = vector.extract_strided_slice %138 {offsets = [0, 0], sizes = [2, 32], strides = [1, 1]} : vector<2x96xf32> to vector<2x32xf32>
    %142 = vector.extract_strided_slice %138 {offsets = [0, 32], sizes = [2, 32], strides = [1, 1]} : vector<2x96xf32> to vector<2x32xf32>
    %143 = vector.extract_strided_slice %138 {offsets = [0, 64], sizes = [2, 32], strides = [1, 1]} : vector<2x96xf32> to vector<2x32xf32>
    %144 = arith.mulf %142, %126 : vector<2x32xf32>
    %145 = arith.mulf %141, %140 : vector<2x32xf32>
    %146 = arith.addf %144, %145 : vector<2x32xf32>
    %147 = math.tanh %146 : vector<2x32xf32>
    %148 = arith.mulf %143, %147 : vector<2x32xf32>
    %149 = vector.extract_strided_slice %5 {offsets = [14, 0], sizes = [2, 128], strides = [1, 1]} : vector<16x256xf32> to vector<2x128xf32>
    %150 = arith.truncf %148 : vector<2x32xf32> to vector<2x32xbf16>
    %cst_23 = arith.constant dense<0.000000e+00> : vector<2x128xf32>
    %151 = tpu.matmul %150, %6, %cst_23 {dimension_numbers = #tpu.dot_dimension_numbers<[1], [0], [0], [1], [0, 0, 1, 1], [], []>} : vector<2x32xbf16>, vector<32x128xbf16>, vector<2x128xf32> -> vector<2x128xf32>
    %152 = arith.addf %149, %151 : vector<2x128xf32>
    %153 = vector.extract_strided_slice %152 {offsets = [0, 0], sizes = [2, 96], strides = [1, 1]} : vector<2x128xf32> to vector<2x96xf32>
    %154 = arith.negf %153 : vector<2x96xf32>
    %155 = math.exp %154 : vector<2x96xf32>
    %cst_24 = arith.constant 1.000000e+00 : f32
    %156 = vector.broadcast %cst_24 : f32 to vector<2x96xf32>
    %157 = arith.addf %156, %155 : vector<2x96xf32>
    %158 = arith.divf %156, %157 : vector<2x96xf32>
    %159 = vector.extract_strided_slice %152 {offsets = [0, 96], sizes = [2, 32], strides = [1, 1]} : vector<2x128xf32> to vector<2x32xf32>
    %160 = math.tanh %159 : vector<2x32xf32>
    %161 = vector.extract_strided_slice %158 {offsets = [0, 0], sizes = [2, 32], strides = [1, 1]} : vector<2x96xf32> to vector<2x32xf32>
    %162 = vector.extract_strided_slice %158 {offsets = [0, 32], sizes = [2, 32], strides = [1, 1]} : vector<2x96xf32> to vector<2x32xf32>
    %163 = vector.extract_strided_slice %158 {offsets = [0, 64], sizes = [2, 32], strides = [1, 1]} : vector<2x96xf32> to vector<2x32xf32>
    %164 = arith.mulf %162, %146 : vector<2x32xf32>
    %165 = arith.mulf %161, %160 : vector<2x32xf32>
    %166 = arith.addf %164, %165 : vector<2x32xf32>
    %167 = math.tanh %166 : vector<2x32xf32>
    %168 = arith.mulf %163, %167 : vector<2x32xf32>
    %169 = vector.extract_strided_slice %5 {offsets = [14, 128], sizes = [2, 128], strides = [1, 1]} : vector<16x256xf32> to vector<2x128xf32>
    %170 = vector.extract_strided_slice %169 {offsets = [0, 0], sizes = [2, 96], strides = [1, 1]} : vector<2x128xf32> to vector<2x96xf32>
    %171 = arith.negf %170 : vector<2x96xf32>
    %172 = math.exp %171 : vector<2x96xf32>
    %cst_25 = arith.constant 1.000000e+00 : f32
    %173 = vector.broadcast %cst_25 : f32 to vector<2x96xf32>
    %174 = arith.addf %173, %172 : vector<2x96xf32>
    %175 = arith.divf %173, %174 : vector<2x96xf32>
    %176 = vector.extract_strided_slice %169 {offsets = [0, 96], sizes = [2, 32], strides = [1, 1]} : vector<2x128xf32> to vector<2x32xf32>
    %177 = math.tanh %176 : vector<2x32xf32>
    %178 = vector.extract_strided_slice %175 {offsets = [0, 64], sizes = [2, 32], strides = [1, 1]} : vector<2x96xf32> to vector<2x32xf32>
    %179 = vector.extract_strided_slice %175 {offsets = [0, 0], sizes = [2, 32], strides = [1, 1]} : vector<2x96xf32> to vector<2x32xf32>
    %180 = arith.mulf %179, %177 : vector<2x32xf32>
    %181 = math.tanh %180 : vector<2x32xf32>
    %182 = arith.mulf %178, %181 : vector<2x32xf32>
    %c0_26 = arith.constant 0 : index
    %c0_27 = arith.constant 0 : index
    %183 = vector.load %arg4[%c0_26, %c0_27] : memref<1x32xf32, #tpu.memory_space<vmem>>, vector<1x32xf32>
    %184 = vector.broadcast %183 : vector<1x32xf32> to vector<2x32xf32>
    %185 = arith.mulf %168, %184 : vector<2x32xf32>
    %cst_28 = arith.constant dense<0.000000e+00> : vector<2xf32>
    %186 = vector.multi_reduction <add>, %185, %cst_28 [1] : vector<2x32xf32> to vector<2xf32>
    %187 = vector.shape_cast %186 : vector<2xf32> to vector<2x1xf32>
    %c0_29 = arith.constant 0 : index
    %c0_30 = arith.constant 0 : index
    %188 = vector.load %arg5[%c0_29, %c0_30] : memref<1x32xf32, #tpu.memory_space<vmem>>, vector<1x32xf32>
    %189 = vector.broadcast %188 : vector<1x32xf32> to vector<2x32xf32>
    %190 = arith.mulf %182, %189 : vector<2x32xf32>
    %cst_31 = arith.constant dense<0.000000e+00> : vector<2xf32>
    %191 = vector.multi_reduction <add>, %190, %cst_31 [1] : vector<2x32xf32> to vector<2xf32>
    %192 = vector.shape_cast %191 : vector<2xf32> to vector<2x1xf32>
    %193 = arith.addf %187, %192 : vector<2x1xf32>
    %c0_32 = arith.constant 0 : index
    %194 = memref.load %arg6[%c0_32] : memref<1xf32, #tpu.memory_space<smem>>
    %195 = vector.broadcast %194 : f32 to vector<2x1xf32>
    %196 = arith.addf %193, %195 : vector<2x1xf32>
    %197 = arith.negf %196 : vector<2x1xf32>
    %198 = math.exp %197 : vector<2x1xf32>
    %cst_33 = arith.constant 1.000000e+00 : f32
    %199 = vector.broadcast %cst_33 : f32 to vector<2x1xf32>
    %200 = arith.addf %199, %198 : vector<2x1xf32>
    %201 = arith.divf %199, %200 : vector<2x1xf32>
    %c0_34 = arith.constant 0 : index
    %c0_35 = arith.constant 0 : index
    %202 = vector.load %arg7[%c0_34, %c0_35] : memref<2x1xf32, #tpu.memory_space<vmem>>, vector<2x1xf32>
    tpu.vector_store %arg7[%c0_34, %c0_35], %201 {strides = array<i32>} : memref<2x1xf32, #tpu.memory_space<vmem>>, vector<2x1xf32>,
    return
  }
}

</mosaic_0001>

<llo_original>
// kernel: torch_model_forward.1
$region0: #{torch_model_forward.1}
  #allocation0 [shape = 'u32[]', space=smem, size = 0x4, offset = 0x4, fixed_abs, tag = 'smem constant byte address 0x4 - core index']
  #allocation1 [shape = 'u32[72,128]{1,0:T(1,128)}', space=vmem, size = 0x9000, scoped, tag = 'internal scratch']
  #allocation2 [shape = 'f32[1]{0:T(128)S(6)}', space=smem, size = 0x200, scoped, tag = 'scoped memory for torch_model_forward.1']
  %s0 = inlined_call_operand.vmem [shape: bf16[16,32], index: 0, kind: input, shape index: {}]
  %s1 = inlined_call_operand.vmem [shape: bf16[32,256], index: 1, kind: input, shape index: {}]
  %s2 = inlined_call_operand.vmem [shape: f32[1,256], index: 2, kind: input, shape index: {}]
  %s3 = inlined_call_operand.vmem [shape: bf16[32,128], index: 3, kind: input, shape index: {}]
  %s4 = inlined_call_operand.vmem [shape: f32[1,32], index: 4, kind: input, shape index: {}]
  %s5 = inlined_call_operand.vmem [shape: f32[1,32], index: 5, kind: input, shape index: {}]
  %s6 = inlined_call_operand.<no memory space> [shape: f32[1], index: 6, kind: input, shape index: {}]
  %s7 = inlined_call_operand.vmem [shape: f32[2,1], index: 7, kind: output, shape index: {}]
  %s8 = sld [smem:[#allocation0]]
  $region38: #{torch_model_forward.1} parent=0
    _
  %s10 = ssub.s32 1, %s8
  %s11 = scalar_select 0, %s10, %s8
  %12 = sst [smem:[#allocation2]] %s6
  // Predicated region
  $region2: #{torch_model_forward.1} parent=0 // pred_check
    _
  $region3: #{torch_model_forward.1} parent=0 // pred_check_branch
    %14 = sbr.rel (0) target = $region5
  $region4: #{torch_model_forward.1} parent=0 // pred_region
    _
  $region5: #{torch_model_forward.1} parent=0 // pred_fallthru
    _
  // Predicated region
  $region6: #{torch_model_forward.1} parent=0 // pred_check
    _
  $region7: #{torch_model_forward.1} parent=0 // pred_check_branch
    %16 = sbr.rel (0) target = $region9
  $region8: #{torch_model_forward.1} parent=0 // pred_region
    _
  $region9: #{torch_model_forward.1} parent=0 // pred_fallthru
    _
  // Predicated region
  $region10: #{torch_model_forward.1} parent=0 // pred_check
    _
  $region11: #{torch_model_forward.1} parent=0 // pred_check_branch
    %18 = sbr.rel (0) target = $region13
  $region12: #{torch_model_forward.1} parent=0 // pred_region
    _
  $region13: #{torch_model_forward.1} parent=0 // pred_fallthru
    _
  // Predicated region
  $region14: #{torch_model_forward.1} parent=0 // pred_check
    _
  $region15: #{torch_model_forward.1} parent=0 // pred_check_branch
    %20 = sbr.rel (0) target = $region17
  $region16: #{torch_model_forward.1} parent=0 // pred_region
    _
  $region17: #{torch_model_forward.1} parent=0 // pred_fallthru
    _
  // Predicated region
  $region18: #{torch_model_forward.1} parent=0 // pred_check
    _
  $region19: #{torch_model_forward.1} parent=0 // pred_check_branch
    %22 = sbr.rel (0) target = $region21
  $region20: #{torch_model_forward.1} parent=0 // pred_region
    _
  $region21: #{torch_model_forward.1} parent=0 // pred_fallthru
    _
  // Predicated region
  $region22: #{torch_model_forward.1} parent=0 // pred_check
    _
  $region23: #{torch_model_forward.1} parent=0 // pred_check_branch
    %24 = sbr.rel (0) target = $region25
  $region24: #{torch_model_forward.1} parent=0 // pred_region
    _
  $region25: #{torch_model_forward.1} parent=0 // pred_fallthru
    _
  // Predicated region
  $region26: #{torch_model_forward.1} parent=0 // pred_check
    _
  $region27: #{torch_model_forward.1} parent=0 // pred_check_branch
    %26 = sbr.rel (0) target = $region29
  $region28: #{torch_model_forward.1} parent=0 // pred_region
    _
  $region29: #{torch_model_forward.1} parent=0 // pred_fallthru
    _
  %v28 = vld [vmem:[%s0] sm:$0xf]
  %v29 = vld [vmem:[%s0 + $0x4] sm:$0xf]
  %v30 = vld [vmem:[%s1] sm:$0xff]
  %v31 = vld [vmem:[%s1 + $0x8] sm:$0xff]
  %v32 = vld [vmem:[%s1 + $0x10] sm:$0xff]
  %v33 = vld [vmem:[%s1 + $0x18] sm:$0xff]
  %v34 = vld [vmem:[%s2] sm:$0x3]
  %v36 = vperm.slane %v34, 0
  %v37 = vperm.slane %v34, 1
  %v42 = vunpack.c.l.b16 %v28
  %v43 = vunpack.c.l.b16 %v29
  %v44 = vpack.c.b16 %v43, %v42
  %v49 = vunpack.c.l.b16 %v30
  %v50 = vunpack.c.h.b16 %v30
  %v51 = vunpack.c.l.b16 %v31
  %v52 = vunpack.c.h.b16 %v31
  %v53 = vunpack.c.l.b16 %v32
  %v54 = vunpack.c.h.b16 %v32
  %v55 = vunpack.c.l.b16 %v33
  %v56 = vunpack.c.h.b16 %v33
  %v57 = vpack.c.b16 %v51, %v49
  %v58 = vpack.c.b16 %v52, %v50
  %v59 = vpack.c.b16 %v55, %v53
  %v60 = vpack.c.b16 %v56, %v54
  %vm65 = vcmask 261120
  %v67 = vsel %vm65, %v44, 0
  %69 = vmatpush.bf16.msra.mxu0 0
  %70 = vmatpush.bf16.msra.mxu0 0
  %71 = vmatpush.bf16.msra.mxu0 0
  %72 = vmatpush.bf16.msra.mxu0 0
  %73 = vmatpush.bf16.msra.mxu0 0
  %74 = vmatpush.bf16.msra.mxu0 0
  %75 = vmatpush.bf16.msra.mxu0 %v59
  %76 = vmatpush.bf16.msra.mxu0 %v57
  %77 = vmatmul.bf16.gmra.mxu0 %v67
  %v78 = vpop.f32.mrf.mxu0
  %v79 = vadd.f32 %v36, %v78
  %v80 = vpop.f32.mrf.mxu0
  %v81 = vadd.f32 %v36, %v80
  %82 = vdwg.mxu0
  %83 = vmatpush.bf16.msra.mxu0 0
  %84 = vmatpush.bf16.msra.mxu0 0
  %85 = vmatpush.bf16.msra.mxu0 0
  %86 = vmatpush.bf16.msra.mxu0 0
  %87 = vmatpush.bf16.msra.mxu0 0
  %88 = vmatpush.bf16.msra.mxu0 0
  %89 = vmatpush.bf16.msra.mxu0 %v60
  %90 = vmatpush.bf16.msra.mxu0 %v58
  %91 = vmatmul.bf16.gmra.mxu0 %v67
  %v92 = vpop.f32.mrf.mxu0
  %v93 = vpop.f32.mrf.mxu0
  %v94 = vadd.f32 %v37, %v93
  %95 = vdwg.mxu0
  %v96 = vld [vmem:[%s3] sm:$0xf]
  %v97 = vld [vmem:[%s3 + $0x4] sm:$0xf]
  %v98 = vld [vmem:[%s3 + $0x8] sm:$0xf]
  %v99 = vld [vmem:[%s3 + $0xc] sm:$0xf]
  %v104 = vunpack.c.l.b16 %v96
  %v105 = vunpack.c.l.b16 %v97
  %v106 = vunpack.c.l.b16 %v98
  %v107 = vunpack.c.l.b16 %v99
  %v108 = vpack.c.b16 %v105, %v104
  %v109 = vpack.c.b16 %v107, %v106
  %v113 = vsel %vm65, 0, 0
  %115 = vmatpush.bf16.msra.mxu0 0
  %116 = vmatpush.bf16.msra.mxu0 0
  %117 = vmatpush.bf16.msra.mxu0 0
  %118 = vmatpush.bf16.msra.mxu0 0
  %119 = vmatpush.bf16.msra.mxu0 0
  %120 = vmatpush.bf16.msra.mxu0 0
  %121 = vmatpush.bf16.msra.mxu0 %v109
  %122 = vmatpush.bf16.msra.mxu0 %v108
  %123 = vmatmul.bf16.gmra.mxu0 %v113
  %v124 = vpop.f32.mrf.mxu0
  %v125 = vadd.f32 0.0, %v124
  %v126 = vpop.f32.mrf.mxu0
  %127 = vdwg.mxu0
  %v128 = vadd.f32 %v79, %v125
  %v129 = vxor.u32 %v128, 2147483648
  %v130 = vmul.f32 %v129, 1.442695
  %v131 = vpow.pop %v130
  %v132 = vadd.f32 %v131, 1.0
  %v133 = vrcp.pop %v132
  %v134 = vmul.f32 %v132, %v133
  %v135 = vsub.f32 1.0, %v134
  %v136 = vmul.f32 %v133, %v135
  %v137 = vadd.f32 %v133, %v136
  %vm138 = vweird.f32 %v132
  %vm139 = vweird.f32 %v133
  %vm140 = vmor %vm138, %vm139
  %v141 = vsel %vm140, %v133, %v137
  %v142 = vand.u32 2147483647, %v132
  %vm143 = vcmp.eq.f32.partialorder %v142, 8.507059e+37
  %v144 = vand.u32 %v132, 2147483648
  %v145 = vor.u32 1.1754944e-38, %v144
  %v146 = vsel %vm143, %v145, %v141
  %v147 = vmul.f32 1.0, %v146
  %v148 = vtanh.pop %v128
  %v149 = vmul.f32 %v147, 0.0
  %151 = vrot.lane.b32.xlu0 %v148, 32
  %v152 = vpop.permute.xlu0 %151
  %v154 = vmul.f32 %v147, %v152
  %156 = vrot.lane.b32.xlu0 %v154, 32
  %v157 = vpop.permute.xlu0 %156
  %v159 = vadd.f32 %v149, %v157
  %v160 = vtanh.pop %v159
  %162 = vrot.lane.b32.xlu0 %v160, 32
  %v163 = vpop.permute.xlu0 %162
  %v165 = vmul.f32 %v147, %v163
  %v166 = vpack.c.bf16 %v165, %v165
  %168 = vrot.lane.b32.xlu0 %v166, 64
  %v169 = vpop.permute.xlu0 %168
  %v171 = vsel %vm65, %v169, 0
  %173 = vmatpush.bf16.msra.mxu0 0
  %174 = vmatpush.bf16.msra.mxu0 0
  %175 = vmatpush.bf16.msra.mxu0 0
  %176 = vmatpush.bf16.msra.mxu0 0
  %177 = vmatpush.bf16.msra.mxu0 0
  %178 = vmatpush.bf16.msra.mxu0 0
  %179 = vmatpush.bf16.msra.mxu0 %v109
  %180 = vmatpush.bf16.msra.mxu0 %v108
  %181 = vmatmul.bf16.gmra.mxu0 %v171
  %v182 = vpop.f32.mrf.mxu0
  %v183 = vadd.f32 0.0, %v182
  %v184 = vpop.f32.mrf.mxu0
  %185 = vdwg.mxu0
  %v187 = vrot.slane %v183, 6
  %v189 = vadd.f32 %v79, %v187
  %v190 = vxor.u32 %v189, 2147483648
  %v191 = vmul.f32 %v190, 1.442695
  %v192 = vpow.pop %v191
  %v193 = vadd.f32 %v192, 1.0
  %v194 = vrcp.pop %v193
  %v195 = vmul.f32 %v193, %v194
  %v196 = vsub.f32 1.0, %v195
  %v197 = vmul.f32 %v194, %v196
  %v198 = vadd.f32 %v194, %v197
  %vm199 = vweird.f32 %v193
  %vm200 = vweird.f32 %v194
  %vm201 = vmor %vm199, %vm200
  %v202 = vsel %vm201, %v194, %v198
  %v203 = vand.u32 2147483647, %v193
  %vm204 = vcmp.eq.f32.partialorder %v203, 8.507059e+37
  %v205 = vand.u32 %v193, 2147483648
  %v206 = vor.u32 1.1754944e-38, %v205
  %v207 = vsel %vm204, %v206, %v202
  %v208 = vmul.f32 1.0, %v207
  %v209 = vtanh.pop %v189
  %v211 = vrot.slane %v159, 6
  %v213 = vmul.f32 %v208, %v211
  %215 = vrot.lane.b32.xlu0 %v209, 32
  %v216 = vpop.permute.xlu0 %215
  %v218 = vmul.f32 %v208, %v216
  %220 = vrot.lane.b32.xlu0 %v218, 32
  %v221 = vpop.permute.xlu0 %220
  %v223 = vadd.f32 %v213, %v221
  %v224 = vtanh.pop %v223
  %226 = vrot.lane.b32.xlu0 %v224, 32
  %v227 = vpop.permute.xlu0 %226
  %v229 = vmul.f32 %v208, %v227
  %v230 = vpack.c.bf16 %v229, %v229
  %v232 = vrot.slane %v230, 1
  %233 = vrot.lane.b32.xlu0 %v232, 64
  %v234 = vpop.permute.xlu0 %233
  %v236 = vsel %vm65, %v234, 0
  %238 = vmatpush.bf16.msra.mxu0 0
  %239 = vmatpush.bf16.msra.mxu0 0
  %240 = vmatpush.bf16.msra.mxu0 0
  %241 = vmatpush.bf16.msra.mxu0 0
  %242 = vmatpush.bf16.msra.mxu0 0
  %243 = vmatpush.bf16.msra.mxu0 0
  %244 = vmatpush.bf16.msra.mxu0 %v109
  %245 = vmatpush.bf16.msra.mxu0 %v108
  %246 = vmatmul.bf16.gmra.mxu0 %v236
  %v247 = vpop.f32.mrf.mxu0
  %v248 = vadd.f32 0.0, %v247
  %v249 = vpop.f32.mrf.mxu0
  %250 = vdwg.mxu0
  %v252 = vrot.slane %v248, 4
  %v254 = vadd.f32 %v79, %v252
  %v255 = vxor.u32 %v254, 2147483648
  %v256 = vmul.f32 %v255, 1.442695
  %v257 = vpow.pop %v256
  %v258 = vadd.f32 %v257, 1.0
  %v259 = vrcp.pop %v258
  %v260 = vmul.f32 %v258, %v259
  %v261 = vsub.f32 1.0, %v260
  %v262 = vmul.f32 %v259, %v261
  %v263 = vadd.f32 %v259, %v262
  %vm264 = vweird.f32 %v258
  %vm265 = vweird.f32 %v259
  %vm266 = vmor %vm264, %vm265
  %v267 = vsel %vm266, %v259, %v263
  %v268 = vand.u32 2147483647, %v258
  %vm269 = vcmp.eq.f32.partialorder %v268, 8.507059e+37
  %v270 = vand.u32 %v258, 2147483648
  %v271 = vor.u32 1.1754944e-38, %v270
  %v272 = vsel %vm269, %v271, %v267
  %v273 = vmul.f32 1.0, %v272
  %v274 = vtanh.pop %v254
  %v276 = vrot.slane %v223, 6
  %v278 = vmul.f32 %v273, %v276
  %280 = vrot.lane.b32.xlu0 %v274, 32
  %v281 = vpop.permute.xlu0 %280
  %v283 = vmul.f32 %v273, %v281
  %285 = vrot.lane.b32.xlu0 %v283, 32
  %v286 = vpop.permute.xlu0 %285
  %v288 = vadd.f32 %v278, %v286
  %v289 = vtanh.pop %v288
  %291 = vrot.lane.b32.xlu0 %v289, 32
  %v292 = vpop.permute.xlu0 %291
  %v294 = vmul.f32 %v273, %v292
  %v295 = vpack.c.bf16 %v294, %v294
  %v297 = vrot.slane %v295, 2
  %298 = vrot.lane.b32.xlu0 %v297, 64
  %v299 = vpop.permute.xlu0 %298
  %v301 = vsel %vm65, %v299, 0
  %303 = vmatpush.bf16.msra.mxu0 0
  %304 = vmatpush.bf16.msra.mxu0 0
  %305 = vmatpush.bf16.msra.mxu0 0
  %306 = vmatpush.bf16.msra.mxu0 0
  %307 = vmatpush.bf16.msra.mxu0 0
  %308 = vmatpush.bf16.msra.mxu0 0
  %309 = vmatpush.bf16.msra.mxu0 %v109
  %310 = vmatpush.bf16.msra.mxu0 %v108
  %311 = vmatmul.bf16.gmra.mxu0 %v301
  %v312 = vpop.f32.mrf.mxu0
  %v313 = vadd.f32 0.0, %v312
  %v314 = vpop.f32.mrf.mxu0
  %315 = vdwg.mxu0
  %v317 = vrot.slane %v313, 2
  %v319 = vadd.f32 %v79, %v317
  %v320 = vxor.u32 %v319, 2147483648
  %v321 = vmul.f32 %v320, 1.442695
  %v322 = vpow.pop %v321
  %v323 = vadd.f32 %v322, 1.0
  %v324 = vrcp.pop %v323
  %v325 = vmul.f32 %v323, %v324
  %v326 = vsub.f32 1.0, %v325
  %v327 = vmul.f32 %v324, %v326
  %v328 = vadd.f32 %v324, %v327
  %vm329 = vweird.f32 %v323
  %vm330 = vweird.f32 %v324
  %vm331 = vmor %vm329, %vm330
  %v332 = vsel %vm331, %v324, %v328
  %v333 = vand.u32 2147483647, %v323
  %vm334 = vcmp.eq.f32.partialorder %v333, 8.507059e+37
  %v335 = vand.u32 %v323, 2147483648
  %v336 = vor.u32 1.1754944e-38, %v335
  %v337 = vsel %vm334, %v336, %v332
  %v338 = vmul.f32 1.0, %v337
  %v339 = vtanh.pop %v319
  %v341 = vrot.slane %v288, 6
  %v343 = vmul.f32 %v338, %v341
  %345 = vrot.lane.b32.xlu0 %v339, 32
  %v346 = vpop.permute.xlu0 %345
  %v348 = vmul.f32 %v338, %v346
  %350 = vrot.lane.b32.xlu0 %v348, 32
  %v351 = vpop.permute.xlu0 %350
  %v353 = vadd.f32 %v343, %v351
  %v354 = vtanh.pop %v353
  %356 = vrot.lane.b32.xlu0 %v354, 32
  %v357 = vpop.permute.xlu0 %356
  %v359 = vmul.f32 %v338, %v357
  %v360 = vpack.c.bf16 %v359, %v359
  %v362 = vrot.slane %v360, 3
  %363 = vrot.lane.b32.xlu0 %v362, 64
  %v364 = vpop.permute.xlu0 %363
  %v366 = vsel %vm65, %v364, 0
  %368 = vmatpush.bf16.msra.mxu0 0
  %369 = vmatpush.bf16.msra.mxu0 0
  %370 = vmatpush.bf16.msra.mxu0 0
  %371 = vmatpush.bf16.msra.mxu0 0
  %372 = vmatpush.bf16.msra.mxu0 0
  %373 = vmatpush.bf16.msra.mxu0 0
  %374 = vmatpush.bf16.msra.mxu0 %v109
  %375 = vmatpush.bf16.msra.mxu0 %v108
  %376 = vmatmul.bf16.gmra.mxu0 %v366
  %v377 = vpop.f32.mrf.mxu0
  %v378 = vadd.f32 0.0, %v377
  %v379 = vpop.f32.mrf.mxu0
  %380 = vdwg.mxu0
  %v381 = vadd.f32 %v81, %v378
  %v382 = vxor.u32 %v381, 2147483648
  %v383 = vmul.f32 %v382, 1.442695
  %v384 = vpow.pop %v383
  %v385 = vadd.f32 %v384, 1.0
  %v386 = vrcp.pop %v385
  %v387 = vmul.f32 %v385, %v386
  %v388 = vsub.f32 1.0, %v387
  %v389 = vmul.f32 %v386, %v388
  %v390 = vadd.f32 %v386, %v389
  %vm391 = vweird.f32 %v385
  %vm392 = vweird.f32 %v386
  %vm393 = vmor %vm391, %vm392
  %v394 = vsel %vm393, %v386, %v390
  %v395 = vand.u32 2147483647, %v385
  %vm396 = vcmp.eq.f32.partialorder %v395, 8.507059e+37
  %v397 = vand.u32 %v385, 2147483648
  %v398 = vor.u32 1.1754944e-38, %v397
  %v399 = vsel %vm396, %v398, %v394
  %v400 = vmul.f32 1.0, %v399
  %v401 = vtanh.pop %v381
  %v403 = vrot.slane %v353, 6
  %v405 = vmul.f32 %v400, %v403
  %407 = vrot.lane.b32.xlu0 %v401, 32
  %v408 = vpop.permute.xlu0 %407
  %v410 = vmul.f32 %v400, %v408
  %412 = vrot.lane.b32.xlu0 %v410, 32
  %v413 = vpop.permute.xlu0 %412
  %v415 = vadd.f32 %v405, %v413
  %v416 = vtanh.pop %v415
  %418 = vrot.lane.b32.xlu0 %v416, 32
  %v419 = vpop.permute.xlu0 %418
  %v421 = vmul.f32 %v400, %v419
  %v422 = vpack.c.bf16 %v421, %v421
  %424 = vrot.lane.b32.xlu0 %v422, 64
  %v425 = vpop.permute.xlu0 %424
  %v427 = vsel %vm65, %v425, 0
  %429 = vmatpush.bf16.msra.mxu0 0
  %430 = vmatpush.bf16.msra.mxu0 0
  %431 = vmatpush.bf16.msra.mxu0 0
  %432 = vmatpush.bf16.msra.mxu0 0
  %433 = vmatpush.bf16.msra.mxu0 0
  %434 = vmatpush.bf16.msra.mxu0 0
  %435 = vmatpush.bf16.msra.mxu0 %v109
  %436 = vmatpush.bf16.msra.mxu0 %v108
  %437 = vmatmul.bf16.gmra.mxu0 %v427
  %v438 = vpop.f32.mrf.mxu0
  %v439 = vadd.f32 0.0, %v438
  %v440 = vpop.f32.mrf.mxu0
  %441 = vdwg.mxu0
  %v443 = vrot.slane %v439, 6
  %v445 = vadd.f32 %v81, %v443
  %v446 = vxor.u32 %v445, 2147483648
  %v447 = vmul.f32 %v446, 1.442695
  %v448 = vpow.pop %v447
  %v449 = vadd.f32 %v448, 1.0
  %v450 = vrcp.pop %v449
  %v451 = vmul.f32 %v449, %v450
  %v452 = vsub.f32 1.0, %v451
  %v453 = vmul.f32 %v450, %v452
  %v454 = vadd.f32 %v450, %v453
  %vm455 = vweird.f32 %v449
  %vm456 = vweird.f32 %v450
  %vm457 = vmor %vm455, %vm456
  %v458 = vsel %vm457, %v450, %v454
  %v459 = vand.u32 2147483647, %v449
  %vm460 = vcmp.eq.f32.partialorder %v459, 8.507059e+37
  %v461 = vand.u32 %v449, 2147483648
  %v462 = vor.u32 1.1754944e-38, %v461
  %v463 = vsel %vm460, %v462, %v458
  %v464 = vmul.f32 1.0, %v463
  %v465 = vtanh.pop %v445
  %v467 = vrot.slane %v415, 6
  %v469 = vmul.f32 %v464, %v467
  %471 = vrot.lane.b32.xlu0 %v465, 32
  %v472 = vpop.permute.xlu0 %471
  %v474 = vmul.f32 %v464, %v472
  %476 = vrot.lane.b32.xlu0 %v474, 32
  %v477 = vpop.permute.xlu0 %476
  %v479 = vadd.f32 %v469, %v477
  %v480 = vtanh.pop %v479
  %482 = vrot.lane.b32.xlu0 %v480, 32
  %v483 = vpop.permute.xlu0 %482
  %v485 = vmul.f32 %v464, %v483
  %v486 = vpack.c.bf16 %v485, %v485
  %v488 = vrot.slane %v486, 1
  %489 = vrot.lane.b32.xlu0 %v488, 64
  %v490 = vpop.permute.xlu0 %489
  %v492 = vsel %vm65, %v490, 0
  %494 = vmatpush.bf16.msra.mxu0 0
  %495 = vmatpush.bf16.msra.mxu0 0
  %496 = vmatpush.bf16.msra.mxu0 0
  %497 = vmatpush.bf16.msra.mxu0 0
  %498 = vmatpush.bf16.msra.mxu0 0
  %499 = vmatpush.bf16.msra.mxu0 0
  %500 = vmatpush.bf16.msra.mxu0 %v109
  %501 = vmatpush.bf16.msra.mxu0 %v108
  %502 = vmatmul.bf16.gmra.mxu0 %v492
  %v503 = vpop.f32.mrf.mxu0
  %v504 = vadd.f32 0.0, %v503
  %v505 = vpop.f32.mrf.mxu0
  %506 = vdwg.mxu0
  %v508 = vrot.slane %v504, 4
  %v510 = vadd.f32 %v81, %v508
  %v511 = vxor.u32 %v510, 2147483648
  %v512 = vmul.f32 %v511, 1.442695
  %v513 = vpow.pop %v512
  %v514 = vadd.f32 %v513, 1.0
  %v515 = vrcp.pop %v514
  %v516 = vmul.f32 %v514, %v515
  %v517 = vsub.f32 1.0, %v516
  %v518 = vmul.f32 %v515, %v517
  %v519 = vadd.f32 %v515, %v518
  %vm520 = vweird.f32 %v514
  %vm521 = vweird.f32 %v515
  %vm522 = vmor %vm520, %vm521
  %v523 = vsel %vm522, %v515, %v519
  %v524 = vand.u32 2147483647, %v514
  %vm525 = vcmp.eq.f32.partialorder %v524, 8.507059e+37
  %v526 = vand.u32 %v514, 2147483648
  %v527 = vor.u32 1.1754944e-38, %v526
  %v528 = vsel %vm525, %v527, %v523
  %v529 = vmul.f32 1.0, %v528
  %v530 = vtanh.pop %v510
  %v532 = vrot.slane %v479, 6
  %v534 = vmul.f32 %v529, %v532
  %536 = vrot.lane.b32.xlu0 %v530, 32
  %v537 = vpop.permute.xlu0 %536
  %v539 = vmul.f32 %v529, %v537
  %541 = vrot.lane.b32.xlu0 %v539, 32
  %v542 = vpop.permute.xlu0 %541
  %v544 = vadd.f32 %v534, %v542
  %v545 = vtanh.pop %v544
  %547 = vrot.lane.b32.xlu0 %v545, 32
  %v548 = vpop.permute.xlu0 %547
  %v550 = vmul.f32 %v529, %v548
  %v551 = vpack.c.bf16 %v550, %v550
  %v553 = vrot.slane %v551, 2
  %554 = vrot.lane.b32.xlu0 %v553, 64
  %v555 = vpop.permute.xlu0 %554
  %v557 = vsel %vm65, %v555, 0
  %559 = vmatpush.bf16.msra.mxu0 0
  %560 = vmatpush.bf16.msra.mxu0 0
  %561 = vmatpush.bf16.msra.mxu0 0
  %562 = vmatpush.bf16.msra.mxu0 0
  %563 = vmatpush.bf16.msra.mxu0 0
  %564 = vmatpush.bf16.msra.mxu0 0
  %565 = vmatpush.bf16.msra.mxu0 %v109
  %566 = vmatpush.bf16.msra.mxu0 %v108
  %567 = vmatmul.bf16.gmra.mxu0 %v557
  %v568 = vpop.f32.mrf.mxu0
  %v569 = vadd.f32 0.0, %v568
  %v570 = vpop.f32.mrf.mxu0
  %571 = vdwg.mxu0
  %v573 = vrot.slane %v569, 2
  %v575 = vadd.f32 %v81, %v573
  %v576 = vxor.u32 %v575, 2147483648
  %v577 = vmul.f32 %v576, 1.442695
  %v578 = vpow.pop %v577
  %v579 = vadd.f32 %v578, 1.0
  %v580 = vrcp.pop %v579
  %v581 = vmul.f32 %v579, %v580
  %v582 = vsub.f32 1.0, %v581
  %v583 = vmul.f32 %v580, %v582
  %v584 = vadd.f32 %v580, %v583
  %vm585 = vweird.f32 %v579
  %vm586 = vweird.f32 %v580
  %vm587 = vmor %vm585, %vm586
  %v588 = vsel %vm587, %v580, %v584
  %v589 = vand.u32 2147483647, %v579
  %vm590 = vcmp.eq.f32.partialorder %v589, 8.507059e+37
  %v591 = vand.u32 %v579, 2147483648
  %v592 = vor.u32 1.1754944e-38, %v591
  %v593 = vsel %vm590, %v592, %v588
  %v594 = vmul.f32 1.0, %v593
  %v595 = vtanh.pop %v575
  %v597 = vrot.slane %v544, 6
  %v599 = vmul.f32 %v594, %v597
  %601 = vrot.lane.b32.xlu0 %v595, 32
  %v602 = vpop.permute.xlu0 %601
  %v604 = vmul.f32 %v594, %v602
  %606 = vrot.lane.b32.xlu0 %v604, 32
  %v607 = vpop.permute.xlu0 %606
  %v609 = vadd.f32 %v599, %v607
  %v610 = vtanh.pop %v609
  %612 = vrot.lane.b32.xlu0 %v610, 32
  %v613 = vpop.permute.xlu0 %612
  %v615 = vmul.f32 %v594, %v613
  %v616 = vxor.u32 %v94, 2147483648
  %v617 = vmul.f32 %v616, 1.442695
  %v618 = vpow.pop %v617
  %v619 = vadd.f32 %v618, 1.0
  %v620 = vrcp.pop %v619
  %v621 = vmul.f32 %v619, %v620
  %v622 = vsub.f32 1.0, %v621
  %v623 = vmul.f32 %v620, %v622
  %v624 = vadd.f32 %v620, %v623
  %vm625 = vweird.f32 %v619
  %vm626 = vweird.f32 %v620
  %vm627 = vmor %vm625, %vm626
  %v628 = vsel %vm627, %v620, %v624
  %v629 = vand.u32 2147483647, %v619
  %vm630 = vcmp.eq.f32.partialorder %v629, 8.507059e+37
  %v631 = vand.u32 %v619, 2147483648
  %v632 = vor.u32 1.1754944e-38, %v631
  %v633 = vsel %vm630, %v632, %v628
  %v634 = vmul.f32 1.0, %v633
  %v635 = vtanh.pop %v94
  %637 = vrot.lane.b32.xlu0 %v635, 32
  %v638 = vpop.permute.xlu0 %637
  %v640 = vmul.f32 %v634, %v638
  %v641 = vtanh.pop %v640
  %643 = vrot.lane.b32.xlu0 %v641, 64
  %v644 = vpop.permute.xlu0 %643
  %v646 = vmul.f32 %v634, %v644
  %v647 = vld [vmem:[%s4] sm:$0x1]
  %v649 = vperm.slane %v647, 0
  %650 = vrot.lane.b32.xlu0 %v649, 64
  %v651 = vpop.permute.xlu0 %650
  %v653 = vmul.f32 %v615, %v651
  %655 = vrot.lane.b32.xlu0 %v653, 64
  %v656 = vpop.permute.xlu0 %655
  %vm658 = vcmask 261126
  %v659 = vsel %vm658, %v656, 0.0
  %660 = vadd.xlane.f32.xlu0 %v659
  %v661 = vpop.xlane.xlu0 %660
  %v662 = vld [vmem:[%s5] sm:$0x1]
  %v664 = vperm.slane %v662, 0
  %665 = vrot.lane.b32.xlu0 %v664, 64
  %v666 = vpop.permute.xlu0 %665
  %v668 = vmul.f32 %v646, %v666
  %670 = vrot.lane.b32.xlu0 %v668, 64
  %v671 = vpop.permute.xlu0 %670
  %v673 = vsel %vm658, %v671, 0.0
  %674 = vadd.xlane.f32.xlu0 %v673
  %v675 = vpop.xlane.xlu0 %674
  %v676 = vadd.f32 %v661, %v675
  %s677 = sld [smem:[#allocation2]]
  %v678 = vstv %s677
  %v679 = vadd.f32 %v676, %v678
  %v680 = vxor.u32 %v679, 2147483648
  %v681 = vmul.f32 %v680, 1.442695
  %v682 = vpow.pop %v681
  %v683 = vadd.f32 %v682, 1.0
  %v684 = vrcp.pop %v683
  %v685 = vmul.f32 %v683, %v684
  %v686 = vsub.f32 1.0, %v685
  %v687 = vmul.f32 %v684, %v686
  %v688 = vadd.f32 %v684, %v687
  %vm689 = vweird.f32 %v683
  %vm690 = vweird.f32 %v684
  %vm691 = vmor %vm689, %vm690
  %v692 = vsel %vm691, %v684, %v688
  %v693 = vand.u32 2147483647, %v683
  %vm694 = vcmp.eq.f32.partialorder %v693, 8.507059e+37
  %v695 = vand.u32 %v683, 2147483648
  %v696 = vor.u32 1.1754944e-38, %v695
  %v697 = vsel %vm694, %v696, %v692
  %v698 = vmul.f32 1.0, %v697
  %vm699 = vcmask 7174
  %700 = vst.msk [vmem:[%s7 - $0x6] sm:$0xc0] %vm699, %v698
  // Predicated region
  $region30: #{torch_model_forward.1} parent=0 // pred_check
    _
  $region31: #{torch_model_forward.1} parent=0 // pred_check_branch
    %702 = sbr.rel (0) target = $region33
  $region32: #{torch_model_forward.1} parent=0 // pred_region
    _
  $region33: #{torch_model_forward.1} parent=0 // pred_fallthru
    _
  // Predicated region
  $region34: #{torch_model_forward.1} parent=0 // pred_check
    _
  $region35: #{torch_model_forward.1} parent=0 // pred_check_branch
    %704 = sbr.rel (0) target = $region37
  $region36: #{torch_model_forward.1} parent=0 // pred_region
    _
  $region37: #{torch_model_forward.1} parent=0 // pred_fallthru
    _

</llo_original>
